<compile_context>
chip_gen: v5e
topology: v5e:2x2
jax: 0.10.0
libtpu: 0.0.40
codegen_flags: <defaults>
</compile_context>

<pallas_src>
import functools

import jax
import jax.numpy as jnp
from jax import lax
from jax.experimental import pallas as pl
from jax.experimental.pallas import tpu as pltpu


# ----------------------------------------------------------------------------
# Bilinear interpolation matrices (PyTorch align_corners=False math).
# ----------------------------------------------------------------------------
def _resize_matrix(out_size: int, in_size: int) -> jax.Array:
    scale = in_size / out_size
    src = (jnp.arange(out_size, dtype=jnp.float32) + 0.5) * scale - 0.5
    src = jnp.maximum(src, 0.0)                       # PyTorch clamps to 0
    i0 = jnp.minimum(jnp.floor(src).astype(jnp.int32), in_size - 1)
    i1 = jnp.minimum(i0 + 1, in_size - 1)
    frac = src - i0.astype(jnp.float32)
    rows = jnp.arange(out_size)
    m = jnp.zeros((out_size, in_size), jnp.float32)
    m = m.at[rows, i0].add(1.0 - frac)
    m = m.at[rows, i1].add(frac)
    return m                                          # (out_size, in_size)


def bilinear_resize_nchw(x: jax.Array, out_h: int, out_w: int) -> jax.Array:
    """Separable JAX-side resize (fallback path & reference)."""
    n, c, h, w = x.shape
    if (h, w) == (out_h, out_w):
        return x
    rm = _resize_matrix(out_h, h)                     # (out_h, h)
    cm = _resize_matrix(out_w, w).T                   # (w, out_w)
    xf = x.astype(jnp.float32)
    y = jnp.einsum("oh,nchw->ncow", rm, xf, precision=lax.Precision.HIGHEST)
    y = jnp.einsum("ncow,wk->ncok", y, cm, precision=lax.Precision.HIGHEST)
    return y.astype(x.dtype)


# ----------------------------------------------------------------------------
# Pallas kernel 1: fused (bilinear resize + 1x1 conv), one grid step per image.
#   x_ref : (C1, H1*W1)   activation (lane axis = input spatial, dense)
#   m_ref : (H1*W1, H2*W2) interpolation matrix, resident in VMEM
#   w_ref : (C2, C1)       conv weight (f32), resident
#   b_ref : (C2, 1)        conv bias   (f32), resident
#   o_ref : (C2, H2*W2)    output (lane axis = output spatial, dense)
# ----------------------------------------------------------------------------
def _fused_resize_conv_kernel(x_ref, m_ref, w_ref, b_ref, o_ref, *, conv_first):
    x = x_ref[...].astype(jnp.float32)                          # (C1, HW1)
    if conv_first:       # cheaper when C2 < C1
        t = jnp.dot(w_ref[...], x, preferred_element_type=jnp.float32)      # (C2, HW1)
        y = jnp.dot(t, m_ref[...], preferred_element_type=jnp.float32)      # (C2, HW2)
    else:                # matches PyTorch order (resize, then conv)
        t = jnp.dot(x, m_ref[...], preferred_element_type=jnp.float32)      # (C1, HW2)
        y = jnp.dot(w_ref[...], t, preferred_element_type=jnp.float32)      # (C2, HW2)
    o_ref[...] = (y + b_ref[...]).astype(o_ref.dtype)


def fused_resize_conv(x_nchw, w, b, from_shape, to_shape):
    n = x_nchw.shape[0]
    c1, h1, w1 = from_shape
    c2, h2, w2 = to_shape
    hw1, hw2 = h1 * w1, h2 * w2

    # Dense interpolation matrix M^T = kron(Rh, Rw)^T, shape (HW1, HW2), f32.
    mt = jnp.kron(_resize_matrix(h2, h1), _resize_matrix(w2, w1)).T

    x3 = x_nchw.reshape(n, c1, hw1)
    conv_first = c2 < c1
    kernel = functools.partial(_fused_resize_conv_kernel, conv_first=conv_first)

    itemsize = jnp.dtype(x3.dtype).itemsize
    need = (2 * (c1 * hw1 + c2 * hw2) * itemsize        # double-buffered in/out
            + hw1 * hw2 * 4 + c2 * c1 * 4 + c2 * 4       # resident M, W, b
            + max(c1, c2) * max(hw1, hw2) * 4             # intermediate
            + (1 << 20))
    vmem_limit = int(min(max(2 * need, 32 << 20), 48 << 20))

    out = pl.pallas_call(
        kernel,
        out_shape=jax.ShapeDtypeStruct((n, c2, hw2), x3.dtype),
        grid_spec=pltpu.PrefetchScalarGridSpec(
            num_scalar_prefetch=0,
            grid=(n,),
            in_specs=[
                pl.BlockSpec((None, c1, hw1), lambda bi: (bi, 0, 0)),
                pl.BlockSpec((hw1, hw2), lambda bi: (0, 0)),   # resident
                pl.BlockSpec((c2, c1), lambda bi: (0, 0)),     # resident
                pl.BlockSpec((c2, 1), lambda bi: (0, 0)),      # resident
            ],
            out_specs=pl.BlockSpec((None, c2, hw2), lambda bi: (bi, 0, 0)),
        ),
        compiler_params=pltpu.CompilerParams(
            dimension_semantics=("parallel",),
            vmem_limit_bytes=vmem_limit,
        ),
    )(x3, mt, w.astype(jnp.float32), b.reshape(c2, 1).astype(jnp.float32))
    return out.reshape(n, c2, h2, w2)


# ----------------------------------------------------------------------------
# Pallas kernel 2: tiled NCHW 1x1 conv (no resize / fallback after JAX resize).
# ----------------------------------------------------------------------------
def _conv1x1_mxu_kernel(x_ref, w_ref, b_ref, o_ref):
    # x_ref: (C1, T), w_ref: (C2, C1), b_ref: (C2, 1) f32
    acc = jnp.dot(w_ref[...], x_ref[...], preferred_element_type=jnp.float32)
    o_ref[...] = (acc + b_ref[...]).astype(o_ref.dtype)


def _conv1x1_vpu_kernel(x_ref, w_ref, b_ref, o_ref, *, c1, c2):
    # Tiny-channel path: unrolled scalar*vector FMAs; weight/bias in SMEM.
    t = x_ref.shape[1]
    xs = [x_ref[i1:i1 + 1, :].astype(jnp.float32) for i1 in range(c1)]
    for i2 in range(c2):
        acc = jnp.zeros((1, t), jnp.float32) + b_ref[i2]
        for i1 in range(c1):
            acc = acc + w_ref[i2, i1] * xs[i1]
        o_ref[i2:i2 + 1, :] = acc.astype(o_ref.dtype)


def _choose_spatial_tile(hw: int, target: int = 2048) -> int:
    """Largest tile that divides hw exactly and keeps the lane dim dense."""
    if hw <= target:
        return hw
    t = (target // 128) * 128
    while t >= 128:
        if hw % t == 0:
            return t
        t -= 128
    # TODO(synk): hw has no multiple-of-128 divisor; fall back to full extent.
    return hw


def conv1x1_nchw(x3: jax.Array, w: jax.Array, b: jax.Array, *,
                 target_tile: int = 2048) -> jax.Array:
    """x3: (N, C1, HW), w: (C2, C1), b: (C2,) -> (N, C2, HW) via Pallas."""
    n, c1, hw = x3.shape
    c2 = w.shape[0]

    t_hw = _choose_spatial_tile(hw, target_tile)
    grid = (n, hw // t_hw)

    itemsize = jnp.dtype(x3.dtype).itemsize
    need = 2 * (c1 + c2) * t_hw * itemsize + (c2 * c1 + c2) * 4 + (1 << 20)
    vmem_limit = int(min(max(2 * need, 32 << 20), 48 << 20))

    use_mxu = (c1 >= 16) and (c2 >= 16)
    if use_mxu:
        kernel = _conv1x1_mxu_kernel
        w_arg = w.astype(x3.dtype)
        b_arg = b.reshape(c2, 1).astype(jnp.float32)
        w_spec = pl.BlockSpec((c2, c1), lambda bi, si: (0, 0))      # resident
        b_spec = pl.BlockSpec((c2, 1), lambda bi, si: (0, 0))       # resident
    else:
        kernel = functools.partial(_conv1x1_vpu_kernel, c1=c1, c2=c2)
        w_arg = w.astype(jnp.float32)
        b_arg = b.astype(jnp.float32)
        w_spec = pl.BlockSpec(memory_space=pltpu.MemorySpace.SMEM)  # scalars
        b_spec = pl.BlockSpec(memory_space=pltpu.MemorySpace.SMEM)

    out = pl.pallas_call(
        kernel,
        out_shape=jax.ShapeDtypeStruct((n, c2, hw), x3.dtype),
        grid_spec=pltpu.PrefetchScalarGridSpec(
            num_scalar_prefetch=0,
            grid=grid,
            in_specs=[
                pl.BlockSpec((None, c1, t_hw), lambda bi, si: (bi, 0, si)),
                w_spec,
                b_spec,
            ],
            out_specs=pl.BlockSpec((None, c2, t_hw), lambda bi, si: (bi, 0, si)),
        ),
        compiler_params=pltpu.CompilerParams(
            dimension_semantics=("parallel", "parallel"),
            vmem_limit_bytes=vmem_limit,
        ),
    )(x3, w_arg, b_arg)
    return out


# ----------------------------------------------------------------------------
# Conv1x1StitchingLayer forward
# ----------------------------------------------------------------------------
class Conv1x1StitchingLayerPallas:
    # Gates for the fused (single-kernel) resize+conv path.
    _MAX_M_BYTES = 8 << 20      # kron matrix footprint / FLOP blow-up guard
    _MAX_VMEM_NEED = 40 << 20   # stay well under v7x's 64 MiB physical VMEM

    def __init__(self, from_shape, to_shape, key):
        self.from_shape = from_shape  # (C1, H1, W1)
        self.to_shape = to_shape      # (C2, H2, W2)
        c1 = from_shape[0]
        c2 = to_shape[0]
        kw, kb = jax.random.split(key)
        bound = 1.0 / float(c1) ** 0.5
        # PyTorch conv weight is (C2, C1, 1, 1); we store its (C2, C1) matrix.
        self.weight = jax.random.uniform(kw, (c2, c1), jnp.float32, -bound, bound)
        self.bias = jax.random.uniform(kb, (c2,), jnp.float32, -bound, bound)

    def __call__(self, x_nchw: jax.Array) -> jax.Array:
        c1, h1, w1 = self.from_shape
        c2, h2, w2 = self.to_shape
        n = x_nchw.shape[0]
        need_resize = (h1, w1) != (h2, w2)

        if not need_resize:
            x3 = x_nchw.reshape(n, c1, h1 * w1)
            y3 = conv1x1_nchw(x3, self.weight, self.bias)
            return y3.reshape(n, c2, h2, w2)

        hw1, hw2 = h1 * w1, h2 * w2
        itemsize = jnp.dtype(x_nchw.dtype).itemsize
        m_bytes = hw1 * hw2 * 4
        fused_need = (2 * (c1 * hw1 + c2 * hw2) * itemsize + m_bytes
                      + (c2 * c1 + c2) * 4 + max(c1, c2) * max(hw1, hw2) * 4)
        if m_bytes <= self._MAX_M_BYTES and fused_need <= self._MAX_VMEM_NEED:
            # Single fused kernel: no HBM round trip for the resized tensor.
            return fused_resize_conv(x_nchw, self.weight, self.bias,
                                     self.from_shape, self.to_shape)

        # Large feature maps: separable JAX resize + tiled Pallas conv.
        x_r = bilinear_resize_nchw(x_nchw, h2, w2)
        x3 = x_r.reshape(n, c1, hw2)
        y3 = conv1x1_nchw(x3, self.weight, self.bias)
        return y3.reshape(n, c2, h2, w2)


# ----------------------------------------------------------------------------
# Self-test
# ----------------------------------------------------------------------------
def _reference(layer, x):
    c2, h2, w2 = layer.to_shape
    x_r = bilinear_resize_nchw(x, h2, w2)
    y = jnp.einsum("oc,nchw->nohw", layer.weight, x_r,
                   precision=lax.Precision.HIGHEST)
    return y + layer.bias[None, :, None, None]


if __name__ == "__main__":
    key = jax.random.PRNGKey(0)
    keys = jax.random.split(key, 8)
    batch = 2

    # Case 1: bilinear resize + small channels (fused kernel, resize-first).
    from_shape = (4, 16, 16)
    to_shape = (8, 8, 8)
    x = jax.random.normal(keys[0], (batch,) + from_shape, jnp.float32)  # NCHW
    layer = Conv1x1StitchingLayerPallas(from_shape, to_shape, keys[1])
    y = jax.block_until_ready(layer(x))
    assert y.shape == (batch,) + to_shape, y.shape
    err = float(jnp.max(jnp.abs(y - _reference(layer, x))))
    assert err < 5e-2, err

    # Case 2: larger channels, no resize (tiled MXU conv kernel).
    from_shape2 = (32, 8, 8)
    to_shape2 = (32, 8, 8)
    x2 = jax.random.normal(keys[2], (batch,) + from_shape2, jnp.float32)
    layer2 = Conv1x1StitchingLayerPallas(from_shape2, to_shape2, keys[3])
    y2 = jax.block_until_ready(layer2(x2))
    assert y2.shape == (batch,) + to_shape2, y2.shape
    err2 = float(jnp.max(jnp.abs(y2 - _reference(layer2, x2))))
    assert err2 < 5e-2, err2

    # Case 3: resize with channel reduction (fused kernel, conv-first order).
    from_shape3 = (32, 16, 16)
    to_shape3 = (16, 8, 8)
    x3 = jax.random.normal(keys[4], (batch,) + from_shape3, jnp.float32)
    layer3 = Conv1x1StitchingLayerPallas(from_shape3, to_shape3, keys[5])
    y3 = jax.block_until_ready(layer3(x3))
    assert y3.shape == (batch,) + to_shape3, y3.shape
    err3 = float(jnp.max(jnp.abs(y3 - _reference(layer3, x3))))
    assert err3 < 5e-2, err3

    # Case 4: no resize, tiny channels (VPU broadcast-FMA path, SMEM scalars).
    from_shape4 = (4, 8, 8)
    to_shape4 = (6, 8, 8)
    x4 = jax.random.normal(keys[6], (batch,) + from_shape4, jnp.float32)
    layer4 = Conv1x1StitchingLayerPallas(from_shape4, to_shape4, keys[7])
    y4 = jax.block_until_ready(layer4(x4))
    assert y4.shape == (batch,) + to_shape4, y4.shape
    err4 = float(jnp.max(jnp.abs(y4 - _reference(layer4, x4))))
    assert err4 < 1e-3, err4

    print("KERNEL_OK")
</pallas_src>

<mosaic_0001>
module attributes {stable_mosaic.version = 11 : i64} {
  func.func @_fused_resize_conv_kernel(%arg0: i32, %arg1: memref<1x4x256xf32, #tpu.memory_space<vmem>>, %arg2: memref<256x64xf32, #tpu.memory_space<vmem>>, %arg3: memref<8x4xf32, #tpu.memory_space<vmem>>, %arg4: memref<8x1xf32, #tpu.memory_space<vmem>>, %arg5: memref<1x8x64xf32, #tpu.memory_space<vmem>>) attributes {dimension_semantics = [#tpu.dimension_semantics<parallel>], iteration_bounds = array<i64: 2>, scalar_prefetch = 0 : i64, scratch_operands = 0 : i64, tpu.core_type = #tpu.core_type<tc>, window_params = [{transform_indices = @transform_0, window_bounds = array<i64: 1, 4, 256>}, {pipeline_mode = #tpu.pipeline_mode<synchronous>, transform_indices = @transform_1, window_bounds = array<i64: 256, 64>}, {pipeline_mode = #tpu.pipeline_mode<synchronous>, transform_indices = @transform_2, window_bounds = array<i64: 8, 4>}, {pipeline_mode = #tpu.pipeline_mode<synchronous>, transform_indices = @transform_3, window_bounds = array<i64: 8, 1>}, {transform_indices = @transform_4, window_bounds = array<i64: 1, 8, 64>}]} {
    %c0 = arith.constant 0 : index
    %c0_0 = arith.constant 0 : index
    %c0_1 = arith.constant 0 : index
    %0 = vector.load %arg1[%c0, %c0_0, %c0_1] : memref<1x4x256xf32, #tpu.memory_space<vmem>>, vector<1x4x256xf32>
    %1 = vector.shape_cast %0 : vector<1x4x256xf32> to vector<4x256xf32>
    %c0_2 = arith.constant 0 : index
    %c0_3 = arith.constant 0 : index
    %2 = vector.load %arg2[%c0_2, %c0_3] : memref<256x64xf32, #tpu.memory_space<vmem>>, vector<256x64xf32>
    %cst = arith.constant dense<0.000000e+00> : vector<4x64xf32>
    %3 = tpu.matmul %1, %2, %cst {dimension_numbers = #tpu.dot_dimension_numbers<[1], [0], [0], [1], [0, 0, 1, 1], [], []>} : vector<4x256xf32>, vector<256x64xf32>, vector<4x64xf32> -> vector<4x64xf32>
    %c0_4 = arith.constant 0 : index
    %c0_5 = arith.constant 0 : index
    %4 = vector.load %arg3[%c0_4, %c0_5] : memref<8x4xf32, #tpu.memory_space<vmem>>, vector<8x4xf32>
    %cst_6 = arith.constant dense<0.000000e+00> : vector<8x64xf32>
    %5 = tpu.matmul %4, %3, %cst_6 {dimension_numbers = #tpu.dot_dimension_numbers<[1], [0], [0], [1], [0, 0, 1, 1], [], []>} : vector<8x4xf32>, vector<4x64xf32>, vector<8x64xf32> -> vector<8x64xf32>
    %c0_7 = arith.constant 0 : index
    %c0_8 = arith.constant 0 : index
    %6 = vector.load %arg4[%c0_7, %c0_8] : memref<8x1xf32, #tpu.memory_space<vmem>>, vector<8x1xf32>
    %7 = vector.broadcast %6 : vector<8x1xf32> to vector<8x64xf32>
    %8 = arith.addf %5, %7 : vector<8x64xf32>
    %c0_9 = arith.constant 0 : index
    %c0_10 = arith.constant 0 : index
    %c0_11 = arith.constant 0 : index
    %9 = vector.load %arg5[%c0_9, %c0_10, %c0_11] : memref<1x8x64xf32, #tpu.memory_space<vmem>>, vector<1x8x64xf32>
    %10 = vector.shape_cast %9 : vector<1x8x64xf32> to vector<8x64xf32>
    %11 = vector.shape_cast %8 : vector<8x64xf32> to vector<1x8x64xf32>
    tpu.vector_store %arg5[%c0_9, %c0_10, %c0_11], %11 {strides = array<i32>} : memref<1x8x64xf32, #tpu.memory_space<vmem>>, vector<1x8x64xf32>,
    return
  }
  func.func @transform_0(%arg0: i32) -> (i32, i32, i32) {
    %c0_i32 = arith.constant 0 : i32
    %c0_i32_0 = arith.constant 0 : i32
    %c0_i32_1 = arith.constant 0 : i32
    return %arg0, %c0_i32, %c0_i32_0 : i32, i32, i32
  }
  func.func @transform_1(%arg0: i32) -> (i32, i32) {
    %c0_i32 = arith.constant 0 : i32
    %c0_i32_0 = arith.constant 0 : i32
    %c0_i32_1 = arith.constant 0 : i32
    return %c0_i32, %c0_i32_0 : i32, i32
  }
  func.func @transform_2(%arg0: i32) -> (i32, i32) {
    %c0_i32 = arith.constant 0 : i32
    %c0_i32_0 = arith.constant 0 : i32
    %c0_i32_1 = arith.constant 0 : i32
    return %c0_i32, %c0_i32_0 : i32, i32
  }
  func.func @transform_3(%arg0: i32) -> (i32, i32) {
    %c0_i32 = arith.constant 0 : i32
    %c0_i32_0 = arith.constant 0 : i32
    %c0_i32_1 = arith.constant 0 : i32
    return %c0_i32, %c0_i32_0 : i32, i32
  }
  func.func @transform_4(%arg0: i32) -> (i32, i32, i32) {
    %c0_i32 = arith.constant 0 : i32
    %c0_i32_0 = arith.constant 0 : i32
    %c0_i32_1 = arith.constant 0 : i32
    return %arg0, %c0_i32, %c0_i32_0 : i32, i32, i32
  }
}

</mosaic_0001>

<llo_original>
// kernel: tpu_custom_call.1
$region0: #{tpu_custom_call.1}
  #allocation0 [shape = 'u32[]', space=smem, size = 0x4, offset = 0x4, fixed_abs, tag = 'smem constant byte address 0x4 - core index']
  #allocation1 [shape = 'u32[72,128]{1,0:T(1,128)}', space=vmem, size = 0x9000, scoped, tag = 'internal scratch']
  %s0 = inlined_call_operand.vmem [shape: f32[2,4,256], index: 0, kind: input, shape index: {}]
  %s1 = inlined_call_operand.vmem [shape: f32[256,64], index: 1, kind: input, shape index: {}]
  %s2 = inlined_call_operand.vmem [shape: f32[8,4], index: 2, kind: input, shape index: {}]
  %s3 = inlined_call_operand.vmem [shape: f32[8,1], index: 3, kind: input, shape index: {}]
  %s4 = inlined_call_operand.hbm [shape: f32[2,8,64], index: 4, kind: output, shape index: {}]
  %s5 = sld [smem:[#allocation0]]
  $region49: #{tpu_custom_call.1} parent=0
    _
  %s7 = ssub.s32 1, %s5
  %s8 = scalar_select 0, %s7, %s5
  $region1: #{tpu_custom_call.1} parent=0
    #allocation2 [shape = 'u8[8192]{0}', space=vmem, size = 0x2000, scoped, tag = 'output window, operand 0']
    #allocation3 [shape = 's32[2]{0}', space=sflag, size = 0x8, scoped, tag = 'scoped memory for tpu_custom_call.1']
    %9 = vsyncpa [#allocation3], 0
    %s10 = scalar_lea.sflag [#allocation3], 1
    %11 = vsyncpa %s10, 0
    loop: start=0, step=1, limit=4
    $region2: #{tpu_custom_call.1} parent=1 // loop_pre_header
      _
    $region3: #{tpu_custom_call.1} parent=1 // loop_header
      %s13 = sphi 0, %s17
      %p14 = scmp.ge.s32.totalorder %s13, 4
      %s23 = sphi 0, %s25
      %s26 = sphi 0, %s23
      %s27 = sphi 0, %s26
      %s43 = sphi 0, %s27
      %s47 = sphi 0, %s47
      %s49 = sphi 0, %s47
      %s50 = sphi 0, %s49
      %s64 = sphi 0, %s50
      %s68 = sphi 0, %s68
      %s70 = sphi 0, %s68
      %s71 = sphi 0, %s70
      %s85 = sphi 0, %s71
      %s89 = sphi 0, %s89
      %s91 = sphi 0, %s89
      %s92 = sphi 0, %s91
      %s106 = sphi 0, %s92
      %s112 = sphi 0, %s114
      %s115 = sphi 0, %s112
      %s116 = sphi 0, %s115
      %s132 = sphi 0, %s116
    $region4: #{tpu_custom_call.1} parent=1 // loop_header_branch
      %16 = sbr.rel (%p14) target = $region8
    $region5: #{tpu_custom_call.1} parent=1 // loop_body
      %s18 = ssub.s32 %s13, 1
      %s19 = ssub.s32 %s13, 2
      %s20 = sadd.s32 %s13, 1
      %s21 = ssub.s32 %s13, %s20
      %p22 = scmp.eq.s32.totalorder %s21, 0
      %s24 = sadd.s32 %s23, 1
      %s25 = scalar_select %p22, %s23, %s24
      %p28 = pneg %p22
      %p29 = scmp.eq.s32.totalorder %s13, 1
      %p30 = por %p28, %p29
      %p31 = scmp.ne.s32.totalorder %s23, %s26
      %p32 = scmp.eq.s32.totalorder %s13, 0
      %p33 = por %p31, %p32
      %p34 = scmp.ne.s32.totalorder %s23, %s26
      %p35 = scmp.eq.s32.totalorder %s18, 1
      %p36 = por %p34, %p35
      %p37 = scmp.ne.s32.totalorder %s26, %s27
      %p38 = scmp.eq.s32.totalorder %s18, 0
      %p39 = por %p37, %p38
      %p40 = scmp.ne.s32.totalorder %s26, %s27
      %p41 = scmp.eq.s32.totalorder %s19, 1
      %p42 = por %p40, %p41
      %p44 = scmp.ne.s32.totalorder %s27, %s43
      %p45 = scmp.eq.s32.totalorder %s19, 0
      %p46 = por %p44, %p45
      %s48 = sadd.s32 %s47, 1
      %p51 = scmp.eq.s32.totalorder %s13, 1
      %p52 = scmp.ne.s32.totalorder %s47, %s49
      %p53 = scmp.eq.s32.totalorder %s13, 0
      %p54 = por %p52, %p53
      %p55 = scmp.ne.s32.totalorder %s47, %s49
      %p56 = scmp.eq.s32.totalorder %s18, 1
      %p57 = por %p55, %p56
      %p58 = scmp.ne.s32.totalorder %s49, %s50
      %p59 = scmp.eq.s32.totalorder %s18, 0
      %p60 = por %p58, %p59
      %p61 = scmp.ne.s32.totalorder %s49, %s50
      %p62 = scmp.eq.s32.totalorder %s19, 1
      %p63 = por %p61, %p62
      %p65 = scmp.ne.s32.totalorder %s50, %s64
      %p66 = scmp.eq.s32.totalorder %s19, 0
      %p67 = por %p65, %p66
      %s69 = sadd.s32 %s68, 1
      %p72 = scmp.eq.s32.totalorder %s13, 1
      %p73 = scmp.ne.s32.totalorder %s68, %s70
      %p74 = scmp.eq.s32.totalorder %s13, 0
      %p75 = por %p73, %p74
      %p76 = scmp.ne.s32.totalorder %s68, %s70
      %p77 = scmp.eq.s32.totalorder %s18, 1
      %p78 = por %p76, %p77
      %p79 = scmp.ne.s32.totalorder %s70, %s71
      %p80 = scmp.eq.s32.totalorder %s18, 0
      %p81 = por %p79, %p80
      %p82 = scmp.ne.s32.totalorder %s70, %s71
      %p83 = scmp.eq.s32.totalorder %s19, 1
      %p84 = por %p82, %p83
      %p86 = scmp.ne.s32.totalorder %s71, %s85
      %p87 = scmp.eq.s32.totalorder %s19, 0
      %p88 = por %p86, %p87
      %s90 = sadd.s32 %s89, 1
      %p93 = scmp.eq.s32.totalorder %s13, 1
      %p94 = scmp.ne.s32.totalorder %s89, %s91
      %p95 = scmp.eq.s32.totalorder %s13, 0
      %p96 = por %p94, %p95
      %p97 = scmp.ne.s32.totalorder %s89, %s91
      %p98 = scmp.eq.s32.totalorder %s18, 1
      %p99 = por %p97, %p98
      %p100 = scmp.ne.s32.totalorder %s91, %s92
      %p101 = scmp.eq.s32.totalorder %s18, 0
      %p102 = por %p100, %p101
      %p103 = scmp.ne.s32.totalorder %s91, %s92
      %p104 = scmp.eq.s32.totalorder %s19, 1
      %p105 = por %p103, %p104
      %p107 = scmp.ne.s32.totalorder %s92, %s106
      %p108 = scmp.eq.s32.totalorder %s19, 0
      %p109 = por %p107, %p108
      %s110 = ssub.s32 %s13, %s20
      %p111 = scmp.eq.s32.totalorder %s110, 0
      %s113 = sadd.s32 %s112, 1
      %s114 = scalar_select %p111, %s112, %s113
      %p117 = pneg %p111
      %p118 = scmp.eq.s32.totalorder %s13, 1
      %p119 = por %p117, %p118
      %p120 = scmp.ne.s32.totalorder %s112, %s115
      %p121 = scmp.eq.s32.totalorder %s13, 0
      %p122 = por %p120, %p121
      %p123 = scmp.ne.s32.totalorder %s112, %s115
      %p124 = scmp.eq.s32.totalorder %s18, 1
      %p125 = por %p123, %p124
      %p126 = scmp.ne.s32.totalorder %s115, %s116
      %p127 = scmp.eq.s32.totalorder %s18, 0
      %p128 = por %p126, %p127
      %p129 = scmp.ne.s32.totalorder %s115, %s116
      %p130 = scmp.eq.s32.totalorder %s19, 1
      %p131 = por %p129, %p130
      %p133 = scmp.ne.s32.totalorder %s116, %s132
      %p134 = scmp.eq.s32.totalorder %s19, 0
      %p135 = por %p133, %p134
      %p136 = scmp.le.s32.totalorder 1, %s13
      %p137 = scmp.lt.s32.totalorder %s13, 3
      %p138 = pnand %p136, %p137
      %p139 = pneg %p138
      // Predicated region
      $region9: #{tpu_custom_call.1} parent=5 // pred_check
        _
      $region10: #{tpu_custom_call.1} parent=5 // pred_check_branch
        %141 = sbr.rel (%p138) target = $region12
      $region11: #{tpu_custom_call.1} parent=5 // pred_region
        %s142 = ssub.s32 %s13, 1
        // Predicated region
        $region13: #{tpu_custom_call.1} parent=11 // pred_check
          %p143 = pneg %p60
        $region14: #{tpu_custom_call.1} parent=11 // pred_check_branch
          %145 = sbr.rel (%p143) target = $region16
        $region15: #{tpu_custom_call.1} parent=11 // pred_region
          _
        $region16: #{tpu_custom_call.1} parent=11 // pred_fallthru
          _
        // Predicated region
        $region17: #{tpu_custom_call.1} parent=11 // pred_check
          %p146 = pneg %p81
        $region18: #{tpu_custom_call.1} parent=11 // pred_check_branch
          %148 = sbr.rel (%p146) target = $region20
        $region19: #{tpu_custom_call.1} parent=11 // pred_region
          _
        $region20: #{tpu_custom_call.1} parent=11 // pred_fallthru
          _
        // Predicated region
        $region21: #{tpu_custom_call.1} parent=11 // pred_check
          %p149 = pneg %p102
        $region22: #{tpu_custom_call.1} parent=11 // pred_check_branch
          %151 = sbr.rel (%p149) target = $region24
        $region23: #{tpu_custom_call.1} parent=11 // pred_region
          _
        $region24: #{tpu_custom_call.1} parent=11 // pred_fallthru
          _
      $region12: #{tpu_custom_call.1} parent=5 // pred_fallthru
        _
      %p152 = scmp.lt.s32.totalorder %s13, 2
      // Predicated region
      $region25: #{tpu_custom_call.1} parent=5 // pred_check
        %p153 = pneg %p152
      $region26: #{tpu_custom_call.1} parent=5 // pred_check_branch
        %155 = sbr.rel (%p153) target = $region28
      $region27: #{tpu_custom_call.1} parent=5 // pred_region
        // Predicated region
        $region29: #{tpu_custom_call.1} parent=27 // pred_check
          %p156 = pneg %p33
        $region30: #{tpu_custom_call.1} parent=27 // pred_check_branch
          %158 = sbr.rel (%p156) target = $region32
        $region31: #{tpu_custom_call.1} parent=27 // pred_region
          %p159 = scmp.lt.s32.totalorder %s13, 1
          %s160 = scalar_select %p159, %s13, 1
          %s161 = smul.addr %s160, 2
          %s162 = smul.addr %s161, 4
          %s163 = scalar_lea.vmem %s0, %s162
        $region32: #{tpu_custom_call.1} parent=27 // pred_fallthru
          _
      $region28: #{tpu_custom_call.1} parent=5 // pred_fallthru
        _
      %p164 = scmp.le.s32.totalorder 1, %s13
      %p165 = scmp.lt.s32.totalorder %s13, 3
      %p166 = pnand %p164, %p165
      %p167 = pneg %p166
      // Predicated region
      $region33: #{tpu_custom_call.1} parent=5 // pred_check
        _
      $region34: #{tpu_custom_call.1} parent=5 // pred_check_branch
        %169 = sbr.rel (%p166) target = $region36
      $region35: #{tpu_custom_call.1} parent=5 // pred_region
        %s170 = ssub.s32 %s13, 1
        %p171 = scmp.lt.s32.totalorder %s18, 1
        %s172 = scalar_select %p171, %s18, 1
        %s173 = smul.addr %s172, 2
        %s174 = smul.addr %s173, 4
        %s175 = scalar_lea.vmem %s0, %s174
        %p176 = pneg %p39
        %p177 = pneg %p36
        %p178 = pneg %p60
        %p179 = pneg %p57
        %p180 = pneg %p81
        %p181 = pneg %p78
        %p182 = pneg %p102
        %p183 = pneg %p99
        %p184 = pneg %p128
        %p185 = pneg %p125
        %s186 = sand.u32 %s115, 1
        %s187 = scalar_lea.sflag [#allocation3], %s186
        %s188 = sand.u32 %s115, 1
        %s189 = smul.addr %s188, 8
        %s190 = scalar_lea.vmem [#allocation2], %s189
        %p191 = scmp.lt.s32.totalorder %s18, 1
        %s192 = scalar_select %p191, %s18, 1
        %s193 = smul.addr %s192, 2
        %s194 = smul.addr %s193, 4
        %s195 = scalar_lea.vmem %s0, %s194
        %v196 = vld [vmem:[%s195] sm:$0xff]
        %v197 = vld [vmem:[%s1] sm:$0xff]
        %v198 = vld [vmem:[%s1 + $0x8] sm:$0xff]
        %v199 = vld [vmem:[%s1 + $0x10] sm:$0xff]
        %v200 = vld [vmem:[%s1 + $0x18] sm:$0xff]
        %v201 = vld [vmem:[%s1 + $0x20] sm:$0xff]
        %v202 = vld [vmem:[%s1 + $0x28] sm:$0xff]
        %v203 = vld [vmem:[%s1 + $0x30] sm:$0xff]
        %v204 = vld [vmem:[%s1 + $0x38] sm:$0xff]
        %v205 = vld [vmem:[%s1 + $0x40] sm:$0xff]
        %v206 = vld [vmem:[%s1 + $0x48] sm:$0xff]
        %v207 = vld [vmem:[%s1 + $0x50] sm:$0xff]
        %v208 = vld [vmem:[%s1 + $0x58] sm:$0xff]
        %v209 = vld [vmem:[%s1 + $0x60] sm:$0xff]
        %v210 = vld [vmem:[%s1 + $0x68] sm:$0xff]
        %v211 = vld [vmem:[%s1 + $0x70] sm:$0xff]
        %v212 = vld [vmem:[%s1 + $0x78] sm:$0xff]
        %v213 = vld [vmem:[%s1 + $0x80] sm:$0xff]
        %v214 = vld [vmem:[%s1 + $0x88] sm:$0xff]
        %v215 = vld [vmem:[%s1 + $0x90] sm:$0xff]
        %v216 = vld [vmem:[%s1 + $0x98] sm:$0xff]
        %v217 = vld [vmem:[%s1 + $0xa0] sm:$0xff]
        %v218 = vld [vmem:[%s1 + $0xa8] sm:$0xff]
        %v219 = vld [vmem:[%s1 + $0xb0] sm:$0xff]
        %v220 = vld [vmem:[%s1 + $0xb8] sm:$0xff]
        %v221 = vld [vmem:[%s1 + $0xc0] sm:$0xff]
        %v222 = vld [vmem:[%s1 + $0xc8] sm:$0xff]
        %v223 = vld [vmem:[%s1 + $0xd0] sm:$0xff]
        %v224 = vld [vmem:[%s1 + $0xd8] sm:$0xff]
        %v225 = vld [vmem:[%s1 + $0xe0] sm:$0xff]
        %v226 = vld [vmem:[%s1 + $0xe8] sm:$0xff]
        %v227 = vld [vmem:[%s1 + $0xf0] sm:$0xff]
        %v228 = vld [vmem:[%s1 + $0xf8] sm:$0xff]
        %230 = vst [vmem:[#allocation1] ss:$2 sm:$0xff] %v196
        %v231 = vld.sshfl [vmem:[#allocation1] sm:$0xff pattern:$0x75316420]
        %v232 = vld.sshfl [vmem:[#allocation1 + $0x8] sm:$0xff pattern:$0x75316420]
        %235 = vmatpush.msra.mxu0 %v212
        %236 = vmatpush.msra.mxu0 %v211
        %237 = vmatpush.msra.mxu0 %v210
        %238 = vmatpush.msra.mxu0 %v209
        %239 = vmatpush.msra.mxu0 %v208
        %240 = vmatpush.msra.mxu0 %v207
        %241 = vmatpush.msra.mxu0 %v206
        %242 = vmatpush.msra.mxu0 %v205
        %243 = vmatpush.msra.mxu0 %v204
        %244 = vmatpush.msra.mxu0 %v203
        %245 = vmatpush.msra.mxu0 %v202
        %246 = vmatpush.msra.mxu0 %v201
        %247 = vmatpush.msra.mxu0 %v200
        %248 = vmatpush.msra.mxu0 %v199
        %249 = vmatpush.msra.mxu0 %v198
        %250 = vmatpush.msra.mxu0 %v197
        %251 = vmatmul.f32.gmra.mxu0 %v231
        %v252 = vpop.f32.mrf.mxu0
        %v253 = vadd.f32 0.0, %v252
        %254 = vdwg.mxu0
        %255 = vmatpush.msra.mxu0 %v228
        %256 = vmatpush.msra.mxu0 %v227
        %257 = vmatpush.msra.mxu0 %v226
        %258 = vmatpush.msra.mxu0 %v225
        %259 = vmatpush.msra.mxu0 %v224
        %260 = vmatpush.msra.mxu0 %v223
        %261 = vmatpush.msra.mxu0 %v222
        %262 = vmatpush.msra.mxu0 %v221
        %263 = vmatpush.msra.mxu0 %v220
        %264 = vmatpush.msra.mxu0 %v219
        %265 = vmatpush.msra.mxu0 %v218
        %266 = vmatpush.msra.mxu0 %v217
        %267 = vmatpush.msra.mxu0 %v216
        %268 = vmatpush.msra.mxu0 %v215
        %269 = vmatpush.msra.mxu0 %v214
        %270 = vmatpush.msra.mxu0 %v213
        %271 = vmatmul.f32.gmra.mxu0 %v232
        %v272 = vpop.f32.mrf.mxu0
        %v273 = vadd.f32 %v253, %v272
        %274 = vdwg.mxu0
        %v275 = vld [vmem:[%s2] sm:$0xff]
        %v276 = vld [vmem:[%s3] sm:$0xff]
        %278 = vset.pattern.permute.xlu0 0
        %279 = vperm.xlu0 %278, %v276
        %v280 = vpop.permute.xlu0 %279
        %vm282 = vcmask 31744
        %v284 = vsel %vm282, %v275, 0
        %vm286 = vcmask 1043456
        %v288 = vsel %vm286, %v273, 0
        %290 = vmatpush.msra.mxu0 0.0
        %291 = vmatpush.msra.mxu0 0.0
        %292 = vmatpush.msra.mxu0 0.0
        %293 = vmatpush.msra.mxu0 0.0
        %294 = vmatpush.msra.mxu0 0.0
        %295 = vmatpush.msra.mxu0 0.0
        %296 = vmatpush.msra.mxu0 0.0
        %297 = vmatpush.msra.mxu0 0.0
        %298 = vmatpush.msra.mxu0 0.0
        %299 = vmatpush.msra.mxu0 0.0
        %300 = vmatpush.msra.mxu0 0.0
        %301 = vmatpush.msra.mxu0 0.0
        %302 = vmatpush.msra.mxu0 0.0
        %303 = vmatpush.msra.mxu0 0.0
        %304 = vmatpush.msra.mxu0 0.0
        %305 = vmatpush.msra.mxu0 %v288
        %306 = vmatmul.f32.gmra.mxu0 %v284
        %v307 = vpop.f32.mrf.mxu0
        %v308 = vadd.f32 %v280, %v307
        %309 = vdwg.mxu0
        %vm310 = vcmask 523264
        %311 = vst.msk [vmem:[%s190] sm:$0xff] %vm310, %v308
        %s312 = sand.u32 %s115, 1
        %s313 = scalar_lea.sflag [#allocation3], %s312
        %s314 = sand.u32 %s115, 1
        %s315 = smul.addr %s314, 8
        %s316 = scalar_lea.vmem [#allocation2], %s315
        // Predicated region
        $region37: #{tpu_custom_call.1} parent=35 // pred_check
          %p317 = pneg %p125
        $region38: #{tpu_custom_call.1} parent=35 // pred_check_branch
          %319 = sbr.rel (%p317) target = $region40
        $region39: #{tpu_custom_call.1} parent=35 // pred_region
          %321 = vsyncadd %s313, 0
          %s322 = smul.addr %s18, 8
          %s323 = scalar_lea.hbm %s4, %s322
          %s325 = sshll.u32 %s316, 4
          %s326 = int_to_ptr.vmem [resolvable:$true] %s325
          %s327 = sshll.u32 %s323, 4
          %s328 = int_to_ptr.hbm [resolvable:$true] %s327
          %330 = dma.vmem_to_hbm [thread:$0]  %s326, 128, %s328, %s313
        $region40: #{tpu_custom_call.1} parent=35 // pred_fallthru
          _
      $region36: #{tpu_custom_call.1} parent=5 // pred_fallthru
        _
      %p331 = scmp.le.s32.totalorder 2, %s13
      // Predicated region
      $region41: #{tpu_custom_call.1} parent=5 // pred_check
        %p332 = pneg %p331
      $region42: #{tpu_custom_call.1} parent=5 // pred_check_branch
        %334 = sbr.rel (%p332) target = $region44
      $region43: #{tpu_custom_call.1} parent=5 // pred_region
        %s335 = ssub.s32 %s13, 2
        // Predicated region
        $region45: #{tpu_custom_call.1} parent=43 // pred_check
          %p336 = pneg %p131
        $region46: #{tpu_custom_call.1} parent=43 // pred_check_branch
          %338 = sbr.rel (%p336) target = $region48
        $region47: #{tpu_custom_call.1} parent=43 // pred_region
          %s339 = sand.u32 %s116, 1
          %s340 = scalar_lea.sflag [#allocation3], %s339
          %s341 = sand.u32 %s116, 1
          %s342 = smul.addr %s341, 8
          %s343 = scalar_lea.vmem [#allocation2], %s342
          %345 = dma.done %s340, 128
        $region48: #{tpu_custom_call.1} parent=43 // pred_fallthru
          _
      $region44: #{tpu_custom_call.1} parent=5 // pred_fallthru
        _
    $region6: #{tpu_custom_call.1} parent=1 // loop_footer
      %s17 = sadd.s32 1, %s13
    $region7: #{tpu_custom_call.1} parent=1 // loop_footer_branch
      %12 = sbr.rel target = $region3
    $region8: #{tpu_custom_call.1} parent=1 // loop_exit
      _
    %346 = vsyncpa [#allocation3], 1
    %s347 = scalar_lea.sflag [#allocation3], 1
    %348 = vsyncpa %s347, 1

</llo_original>
